<compile_context>
chip_gen: v7x
topology: tpu7x:2x2x1
jax: 0.10.0
libtpu: 0.0.40
codegen_flags: <defaults>
</compile_context>

<pallas_src>
import numpy as np
import jax
import jax.numpy as jnp
from jax.experimental import pallas as pl
from jax.experimental.pallas import tpu as pltpu


def _round_up(x, m):
    return ((x + m - 1) // m) * m


# ----------------------------------------------------------------------------
# Pallas kernel: one (tm, tn) output tile per grid step.
#   dense[i*tm + r, j*tn + c] = sum_k [rows[k] == i*tm+r] * [cols[k] == j*tn+c]
# rows/cols are the row-tile-packed COO entries (padding == -1, never matches).
# ----------------------------------------------------------------------------
def _coo_to_dense_kernel(cmin_ref, cmax_ref,     # scalar prefetch (SMEM, int32)
                         row_ref, col_ref,       # (1, K) int32 packed entries
                         out_ref):               # (tm, tn) f32 output tile
    i = pl.program_id(0)
    j = pl.program_id(1)
    tm, tn = out_ref.shape
    K = row_ref.shape[1]

    # Column-range skip: does this row tile touch feature window [j*tn,(j+1)*tn)?
    hit = jnp.logical_and(cmax_ref[i] >= j * tn, cmin_ref[i] < (j + 1) * tn)

    @pl.when(hit)
    def _compute():
        local_rows = row_ref[...] - i * tm            # (1, K), padding -> < 0
        local_cols = col_ref[...] - j * tn            # (1, K)
        row_iota = jax.lax.broadcasted_iota(jnp.int32, (tm, K), 0)
        col_iota = jax.lax.broadcasted_iota(jnp.int32, (tn, K), 0)
        # One-hots are exact 0/1 in bf16; values are 1.0 for every implemented
        # version so no value multiply is needed.
        # TODO(synk): general-valued variants ('obs-diag') would fold f32
        # values in after the matmul (or as one extra multiply on `r`).
        r = (local_rows == row_iota).astype(jnp.bfloat16)   # (tm, K)
        c = (local_cols == col_iota).astype(jnp.bfloat16)   # (tn, K)
        out_ref[...] = jax.lax.dot_general(
            r, c,
            dimension_numbers=(((1,), (1,)), ((), ())),      # contract K (lanes)
            preferred_element_type=jnp.float32).astype(out_ref.dtype)

    @pl.when(jnp.logical_not(hit))
    def _zero():
        out_ref[...] = jnp.zeros_like(out_ref)


# ----------------------------------------------------------------------------
# Host-side builders: deterministic re-implementation of Features.__init__
# ('diag', 'degree', 'diag-degree'), matching the PyTorch module.
# ----------------------------------------------------------------------------
def build_diag_features(num_nodes):
    nodes = np.arange(num_nodes)
    indices = np.stack([nodes, nodes])                   # (2, N)
    values = np.ones(num_nodes, np.float32)
    return indices, values, (num_nodes, num_nodes)
    # TODO(synk): training-time diag dropout (torch.rand > dropout) not implemented.


def build_degree_features(edge_index, num_nodes):
    col = np.asarray(edge_index[1])
    degree = np.zeros(num_nodes, np.int64)
    np.add.at(degree, col, 1)                            # == adj_t.sum(dim=0)
    degree_list = np.unique(degree)
    # PyTorch uses zeros_like(degree) (len num_nodes); size defensively so we
    # don't crash when max degree >= num_nodes (identical output otherwise).
    degree_map = np.zeros(max(num_nodes, int(degree.max()) + 1), np.int64)
    degree_map[degree_list] = np.arange(len(degree_list))
    indices = np.stack([np.arange(num_nodes), degree_map[degree]])
    values = np.ones(indices.shape[1], np.float32)
    shape = (num_nodes, int(indices[1].max() + 1))
    return indices, values, shape


def build_diag_degree_features(edge_index, num_nodes):
    i1, v1, s1 = build_diag_features(num_nodes)
    i2, v2, s2 = build_degree_features(edge_index, num_nodes)
    # NOTE: matches the PyTorch module exactly — degree column indices are NOT
    # offset by num_nodes even though the shape is widened to s1[1] + s2[1];
    # degree one-hots overlap the diag block, last s2[1] columns stay zero.
    indices = np.concatenate([i1, i2], axis=1)
    values = np.concatenate([v1, v2])
    shape = (s1[0], s1[1] + s2[1])
    return indices, values, shape


# ----------------------------------------------------------------------------
# JAX/Pallas equivalent of the PyTorch `Features` module.
# ----------------------------------------------------------------------------
class FeaturesPallas:
    def __init__(self, edge_index, num_nodes, version="diag-degree",
                 tile_m=512, tile_n=512):
        if version == "diag":
            indices, values, shape = build_diag_features(num_nodes)
        elif version == "degree":
            indices, values, shape = build_degree_features(edge_index, num_nodes)
        elif version == "diag-degree":
            indices, values, shape = build_diag_degree_features(edge_index, num_nodes)
        else:
            raise ValueError(version)
        # TODO(synk): 'obs-diag' variant (needs obs_nodes / obs_features) not implemented.
        self.indices = indices                 # non-trainable constants (numpy)
        self.values = values
        self.shape = (int(shape[0]), int(shape[1]))
        self._dense_cache = None
        self._prepare(tile_m, tile_n)

    # All sorting / per-row-tile packing / H2D transfers happen exactly once.
    def _prepare(self, tile_m, tile_n):
        n, f = self.shape
        rows = np.asarray(self.indices[0], np.int64)
        cols = np.asarray(self.indices[1], np.int64)

        order = np.argsort(rows, kind="stable")
        rows, cols = rows[order], cols[order]

        tn = int(min(_round_up(max(tile_n, 1), 128), _round_up(max(f, 1), 128)))
        tm = int(min(_round_up(max(tile_m, 1), 8), _round_up(max(n, 1), 8)))

        def tile_stats(tm_):
            n_pad_ = _round_up(max(n, 1), tm_)
            nt_ = n_pad_ // tm_
            bounds_ = np.searchsorted(rows, np.arange(nt_ + 1) * tm_, side="left")
            counts_ = bounds_[1:] - bounds_[:-1]
            k_ = _round_up(int(max(int(counts_.max()) if counts_.size else 1, 1)), 128)
            return n_pad_, nt_, bounds_, k_

        # Keep (one-hots + iotas + double-buffered out tile) comfortably inside
        # the scoped-VMEM budget on every generation (v7x is the tightest).
        vmem_budget = 20 * 1024 * 1024
        while True:
            n_pad, n_row_tiles, bounds, K = tile_stats(tm)
            est = (tm + tn) * K * (2 + 4) + 2 * tm * tn * 4
            if est <= vmem_budget or tm <= 8:
                break
            tm = max(8, _round_up(tm // 2, 8))

        f_pad = _round_up(max(f, 1), tn)
        n_col_tiles = f_pad // tn

        # Per-row-tile packed entries (sentinel -1 never matches any local index)
        # and per-row-tile touched-column range for the feature-tile skip.
        rows_pk = np.full((1, n_row_tiles * K), -1, np.int32)
        cols_pk = np.full((1, n_row_tiles * K), -1, np.int32)
        cmin = np.full((n_row_tiles,), f_pad, np.int32)
        cmax = np.full((n_row_tiles,), -1, np.int32)
        for i in range(n_row_tiles):
            lo, hi = int(bounds[i]), int(bounds[i + 1])
            cnt = hi - lo
            if cnt > 0:
                rows_pk[0, i * K:i * K + cnt] = rows[lo:hi].astype(np.int32)
                cols_pk[0, i * K:i * K + cnt] = cols[lo:hi].astype(np.int32)
                cmin[i] = int(cols[lo:hi].min())
                cmax[i] = int(cols[lo:hi].max())

        chunk_spec = pl.BlockSpec((1, K), lambda i, j, cmin_r, cmax_r: (0, i))
        out_spec = pl.BlockSpec((tm, tn), lambda i, j, cmin_r, cmax_r: (i, j))

        self._call = pl.pallas_call(
            _coo_to_dense_kernel,
            out_shape=jax.ShapeDtypeStruct((n_pad, f_pad), jnp.float32),
            grid_spec=pltpu.PrefetchScalarGridSpec(
                num_scalar_prefetch=2,
                grid=(n_row_tiles, n_col_tiles),
                in_specs=[chunk_spec, chunk_spec],
                out_specs=out_spec,
            ),
            compiler_params=pltpu.CompilerParams(
                dimension_semantics=("parallel", "parallel"),
                vmem_limit_bytes=32 * 1024 * 1024),
        )

        self._cmin = jnp.asarray(cmin)
        self._cmax = jnp.asarray(cmax)
        self._rows = jnp.asarray(rows_pk)
        self._cols = jnp.asarray(cols_pk)
        self._dims = (n, f, n_pad, f_pad)

    def forward(self):
        # PyTorch returns a sparse COO tensor; this returns its dense
        # materialization.  Result is cached (indices/values are static,
        # non-trainable), so the pallas_call and the one un-pad slice run once.
        if self._dense_cache is None:
            n, f, n_pad, f_pad = self._dims
            out = self._call(self._cmin, self._cmax, self._rows, self._cols)
            if (n_pad, f_pad) != (n, f):
                out = out[:n, :f]          # one-time; padded region is exact zeros
            self._dense_cache = out
        return self._dense_cache


if __name__ == "__main__":
    key = jax.random.PRNGKey(0)

    def make_edge_index(k, num_nodes, num_edges):
        k_src, k_dst = jax.random.split(k)
        src = jax.random.randint(k_src, (num_edges,), 0, num_nodes, dtype=jnp.int32)
        dst = jax.random.randint(k_dst, (num_edges,), 0, num_nodes, dtype=jnp.int32)
        return np.stack([np.asarray(src), np.asarray(dst)])     # (2, E)

    def check(feats):
        dense = np.asarray(jax.block_until_ready(feats.forward()))
        assert dense.shape == feats.shape
        # Reference: numpy scatter-add == torch.sparse_coo_tensor(...).to_dense()
        ref = np.zeros(feats.shape, np.float32)
        np.add.at(ref,
                  (np.asarray(feats.indices[0]), np.asarray(feats.indices[1])),
                  np.asarray(feats.values, np.float32))
        np.testing.assert_allclose(dense, ref, rtol=0, atol=1e-6)

    k1, k2 = jax.random.split(key)
    edges_small = make_edge_index(k1, 16, 48)        # small config implied by module
    edges_big = make_edge_index(k2, 150, 600)

    # Default tiles, single-tile grid.
    check(FeaturesPallas(edges_small, 16, version="diag-degree"))
    # Small tile overrides -> multi row/column tiles, exercising both the
    # column-range skip (zero write-back) and the compute path.
    check(FeaturesPallas(edges_big, 150, version="diag-degree",
                         tile_m=40, tile_n=128))
    # Other implemented feature versions.
    check(FeaturesPallas(edges_big, 150, version="diag"))
    check(FeaturesPallas(edges_big, 150, version="degree"))

    print("KERNEL_OK")
</pallas_src>

<mosaic_0001>
module attributes {stable_mosaic.version = 11 : i64} {
  func.func @_coo_to_dense_kernel(%arg0: i32, %arg1: i32, %arg2: memref<1xi32, #tpu.memory_space<smem>>, %arg3: memref<1xi32, #tpu.memory_space<smem>>, %arg4: memref<1x128xi32, #tpu.memory_space<vmem>>, %arg5: memref<1x128xi32, #tpu.memory_space<vmem>>, %arg6: memref<16x128xf32, #tpu.memory_space<vmem>>) attributes {dimension_semantics = [#tpu.dimension_semantics<parallel>, #tpu.dimension_semantics<parallel>], iteration_bounds = array<i64: 1, 1>, scalar_prefetch = 2 : i64, scratch_operands = 0 : i64, tpu.core_type = #tpu.core_type<tc>, window_params = [{transform_indices = @transform_0, window_bounds = array<i64: 1, 128>}, {transform_indices = @transform_1, window_bounds = array<i64: 1, 128>}, {transform_indices = @transform_2, window_bounds = array<i64: 16, 128>}]} {
    %0 = arith.index_cast %arg0 : i32 to index
    %1 = memref.load %arg3[%0] : memref<1xi32, #tpu.memory_space<smem>>
    %c128_i32 = arith.constant 128 : i32
    %2 = arith.muli %arg1, %c128_i32 : i32
    %3 = arith.cmpi sge, %1, %2 : i32
    %4 = arith.index_cast %arg0 : i32 to index
    %5 = memref.load %arg2[%4] : memref<1xi32, #tpu.memory_space<smem>>
    %c1_i32 = arith.constant 1 : i32
    %6 = arith.addi %arg1, %c1_i32 : i32
    %c128_i32_0 = arith.constant 128 : i32
    %7 = arith.muli %6, %c128_i32_0 : i32
    %8 = arith.cmpi slt, %5, %7 : i32
    %9 = arith.andi %3, %8 : i1
    %10 = arith.extui %9 : i1 to i32
    %c0_i32 = arith.constant 0 : i32
    %11 = arith.cmpi ne, %10, %c0_i32 : i32
    scf.if %11 {
      %c0 = arith.constant 0 : index
      %c0_2 = arith.constant 0 : index
      %15 = vector.load %arg4[%c0, %c0_2] : memref<1x128xi32, #tpu.memory_space<vmem>>, vector<1x128xi32>
      %c16_i32 = arith.constant 16 : i32
      %16 = arith.muli %arg0, %c16_i32 : i32
      %17 = vector.broadcast %16 : i32 to vector<1x128xi32>
      %18 = arith.subi %15, %17 : vector<1x128xi32>
      %c0_3 = arith.constant 0 : index
      %c0_4 = arith.constant 0 : index
      %19 = vector.load %arg5[%c0_3, %c0_4] : memref<1x128xi32, #tpu.memory_space<vmem>>, vector<1x128xi32>
      %c128_i32_5 = arith.constant 128 : i32
      %20 = arith.muli %arg1, %c128_i32_5 : i32
      %21 = vector.broadcast %20 : i32 to vector<1x128xi32>
      %22 = arith.subi %19, %21 : vector<1x128xi32>
      %23 = tpu.iota {dimensions = array<i32: 0>} : vector<16x128xi32>
      %24 = tpu.iota {dimensions = array<i32: 0>} : vector<128x128xi32>
      %25 = vector.broadcast %18 : vector<1x128xi32> to vector<16x128xi32>
      %26 = arith.cmpi eq, %25, %23 : vector<16x128xi32>
      %27 = arith.extui %26 : vector<16x128xi1> to vector<16x128xi32>
      %28 = arith.sitofp %27 : vector<16x128xi32> to vector<16x128xf32>
      %29 = arith.truncf %28 : vector<16x128xf32> to vector<16x128xbf16>
      %30 = vector.broadcast %22 : vector<1x128xi32> to vector<128x128xi32>
      %31 = arith.cmpi eq, %30, %24 : vector<128x128xi32>
      %32 = arith.extui %31 : vector<128x128xi1> to vector<128x128xi32>
      %33 = arith.sitofp %32 : vector<128x128xi32> to vector<128x128xf32>
      %34 = arith.truncf %33 : vector<128x128xf32> to vector<128x128xbf16>
      %cst = arith.constant dense<0.000000e+00> : vector<16x128xf32>
      %35 = tpu.matmul %29, %34, %cst {dimension_numbers = #tpu.dot_dimension_numbers<[1], [1], [0], [0], [0, 0, 1, 0], [], []>} : vector<16x128xbf16>, vector<128x128xbf16>, vector<16x128xf32> -> vector<16x128xf32>
      %c0_6 = arith.constant 0 : index
      %c0_7 = arith.constant 0 : index
      %36 = vector.load %arg6[%c0_6, %c0_7] : memref<16x128xf32, #tpu.memory_space<vmem>>, vector<16x128xf32>
      tpu.vector_store %arg6[%c0_6, %c0_7], %35 {strides = array<i32>} : memref<16x128xf32, #tpu.memory_space<vmem>>, vector<16x128xf32>,
    } else {
    }
    %true = arith.constant true
    %12 = arith.xori %9, %true : i1
    %13 = arith.extui %12 : i1 to i32
    %c0_i32_1 = arith.constant 0 : i32
    %14 = arith.cmpi ne, %13, %c0_i32_1 : i32
    scf.if %14 {
      %cst = arith.constant 0.000000e+00 : f32
      %15 = vector.broadcast %cst : f32 to vector<16x128xf32>
      %c0 = arith.constant 0 : index
      %c0_2 = arith.constant 0 : index
      %16 = vector.load %arg6[%c0, %c0_2] : memref<16x128xf32, #tpu.memory_space<vmem>>, vector<16x128xf32>
      tpu.vector_store %arg6[%c0, %c0_2], %15 {strides = array<i32>} : memref<16x128xf32, #tpu.memory_space<vmem>>, vector<16x128xf32>,
    } else {
    }
    return
  }
  func.func @transform_0(%arg0: i32, %arg1: i32, %arg2: memref<1xi32, #tpu.memory_space<smem>>, %arg3: memref<1xi32, #tpu.memory_space<smem>>) -> (i32, i32) {
    %c0_i32 = arith.constant 0 : i32
    %c0_i32_0 = arith.constant 0 : i32
    return %c0_i32, %arg0 : i32, i32
  }
  func.func @transform_1(%arg0: i32, %arg1: i32, %arg2: memref<1xi32, #tpu.memory_space<smem>>, %arg3: memref<1xi32, #tpu.memory_space<smem>>) -> (i32, i32) {
    %c0_i32 = arith.constant 0 : i32
    %c0_i32_0 = arith.constant 0 : i32
    return %c0_i32, %arg0 : i32, i32
  }
  func.func @transform_2(%arg0: i32, %arg1: i32, %arg2: memref<1xi32, #tpu.memory_space<smem>>, %arg3: memref<1xi32, #tpu.memory_space<smem>>) -> (i32, i32) {
    %c0_i32 = arith.constant 0 : i32
    return %arg0, %arg1 : i32, i32
  }
}

</mosaic_0001>

<llo_original>
// kernel: tpu_custom_call.1
$region0: #{tpu_custom_call.1}
  #allocation0 [shape = 'u32[]', space=smem, size = 0x4, offset = 0x4, fixed_abs, tag = 'smem constant byte address 0x4 - core index']
  #allocation1 [shape = 'u32[144,128]{1,0:T(1,128)}', space=vmem, size = 0x12000, scoped, tag = 'internal scratch']
  #allocation2 [shape = 's32[1]{0}', space=sflag, size = 0x4, scoped, tag = 'scoped memory for tpu_custom_call.1']
  #allocation3 [shape = 's32[1]{0:T(128)S(6)}', space=smem, size = 0x200, scoped, tag = 'prefetched SMEM operand 0']
  #allocation4 [shape = 's32[1]{0:T(128)S(6)}', space=smem, size = 0x200, scoped, tag = 'prefetched SMEM operand 1']
  %s0 = inlined_call_operand.<no memory space> [shape: s32[1], index: 0, kind: input, shape index: {}]
  %s1 = inlined_call_operand.<no memory space> [shape: s32[1], index: 1, kind: input, shape index: {}]
  %s2 = inlined_call_operand.vmem [shape: s32[1,128], index: 2, kind: input, shape index: {}]
  %s3 = inlined_call_operand.vmem [shape: s32[1,128], index: 3, kind: input, shape index: {}]
  %s4 = inlined_call_operand.hbm [shape: f32[16,128], index: 4, kind: output, shape index: {}]
  %s5 = sld [smem:[#allocation0]]
  $region26: #{tpu_custom_call.1} parent=0
    _
  %s7 = ssub.s32 1, %s5
  %s8 = scalar_select 0, %s7, %s5
  %9 = sst [smem:[#allocation3]] %s0
  %10 = sst [smem:[#allocation4]] %s1
  $region1: #{tpu_custom_call.1} parent=0
    #allocation5 [shape = 'u8[8192]{0}', space=vmem, size = 0x2000, scoped, tag = 'output window, operand 0, single buffered']
    #allocation6 [shape = 's32[1]{0}', space=sflag, size = 0x4, scoped, tag = 'scoped memory for tpu_custom_call.1']
    %11 = vsyncpa [#allocation6], 0
    // Predicated region
    $region2: #{tpu_custom_call.1} parent=1 // pred_check
      _
    $region3: #{tpu_custom_call.1} parent=1 // pred_check_branch
      %13 = sbr.rel (0) target = $region5
    $region4: #{tpu_custom_call.1} parent=1 // pred_region
      _
    $region5: #{tpu_custom_call.1} parent=1 // pred_fallthru
      _
    // Predicated region
    $region6: #{tpu_custom_call.1} parent=1 // pred_check
      _
    $region7: #{tpu_custom_call.1} parent=1 // pred_check_branch
      %15 = sbr.rel (0) target = $region9
    $region8: #{tpu_custom_call.1} parent=1 // pred_region
      _
    $region9: #{tpu_custom_call.1} parent=1 // pred_fallthru
      _
    %s17 = sld [smem:[#allocation4]]
    %s18 = smul.u32 0, 128
    %p19 = scmp.ge.s32.totalorder %s17, %s18
    %s20 = sld [smem:[#allocation3]]
    %s21 = sadd.s32 0, 1
    %s22 = smul.u32 %s21, 128
    %p23 = scmp.lt.s32.totalorder %s20, %s22
    %p24 = pnand %p19, %p23
    %p25 = pneg %p24
    // Predicated region
    $region10: #{tpu_custom_call.1} parent=1 // pred_check
      _
    $region11: #{tpu_custom_call.1} parent=1 // pred_check_branch
      %27 = sbr.rel (%p24) target = $region13
    $region12: #{tpu_custom_call.1} parent=1 // pred_region
      %v28 = vld [vmem:[%s2] sm:$0x1]
      %s29 = smul.u32 0, 16
      %v30 = vstv %s29
      %v31 = vsub.s32 %v28, %v30
      %v32 = vld [vmem:[%s3] sm:$0x1]
      %v33 = vstv %s18
      %v34 = vsub.s32 %v32, %v33
      %v35 = vlaneseq
      %v36 = vshrl.u32 %v35, 7
      %v37 = vadd.s32 %v36, 8
      %v38 = vadd.s32 %v36, 16
      %v39 = vadd.s32 %v36, 24
      %v40 = vadd.s32 %v36, 32
      %v41 = vadd.s32 %v36, 40
      %v42 = vadd.s32 %v36, 48
      %v43 = vadd.s32 %v36, 56
      %v44 = vadd.s32 %v36, 64
      %v45 = vadd.s32 %v36, 72
      %v46 = vadd.s32 %v36, 80
      %v47 = vadd.s32 %v36, 88
      %v48 = vadd.s32 %v36, 96
      %v49 = vadd.s32 %v36, 104
      %v50 = vadd.s32 %v36, 112
      %v51 = vadd.s32 %v36, 120
      %v52 = vlaneseq
      %v53 = vshrl.u32 %v52, 7
      %v54 = vsub.s32 0, %v53
      %v55 = vrot.slane %v31, %v54
      %vm56 = vcmp.eq.s32.totalorder %v55, %v36
      %vm57 = vcmp.eq.s32.totalorder %v55, %v37
      %v58 = vsel %vm56, 1, 0
      %v59 = vsel %vm57, 1, 0
      %v60 = vcvt.s32.f32 %v58
      %v61 = vcvt.s32.f32 %v59
      %v62 = vpack.c.bf16 %v61, %v60
      %v63 = vlaneseq
      %v64 = vshrl.u32 %v63, 7
      %v65 = vsub.s32 0, %v64
      %v66 = vrot.slane %v34, %v65
      %vm67 = vcmp.eq.s32.totalorder %v66, %v36
      %vm68 = vcmp.eq.s32.totalorder %v66, %v37
      %vm69 = vcmp.eq.s32.totalorder %v66, %v38
      %vm70 = vcmp.eq.s32.totalorder %v66, %v39
      %vm71 = vcmp.eq.s32.totalorder %v66, %v40
      %vm72 = vcmp.eq.s32.totalorder %v66, %v41
      %vm73 = vcmp.eq.s32.totalorder %v66, %v42
      %vm74 = vcmp.eq.s32.totalorder %v66, %v43
      %vm75 = vcmp.eq.s32.totalorder %v66, %v44
      %vm76 = vcmp.eq.s32.totalorder %v66, %v45
      %vm77 = vcmp.eq.s32.totalorder %v66, %v46
      %vm78 = vcmp.eq.s32.totalorder %v66, %v47
      %vm79 = vcmp.eq.s32.totalorder %v66, %v48
      %vm80 = vcmp.eq.s32.totalorder %v66, %v49
      %vm81 = vcmp.eq.s32.totalorder %v66, %v50
      %vm82 = vcmp.eq.s32.totalorder %v66, %v51
      %v83 = vsel %vm67, 1, 0
      %v84 = vsel %vm68, 1, 0
      %v85 = vsel %vm69, 1, 0
      %v86 = vsel %vm70, 1, 0
      %v87 = vsel %vm71, 1, 0
      %v88 = vsel %vm72, 1, 0
      %v89 = vsel %vm73, 1, 0
      %v90 = vsel %vm74, 1, 0
      %v91 = vsel %vm75, 1, 0
      %v92 = vsel %vm76, 1, 0
      %v93 = vsel %vm77, 1, 0
      %v94 = vsel %vm78, 1, 0
      %v95 = vsel %vm79, 1, 0
      %v96 = vsel %vm80, 1, 0
      %v97 = vsel %vm81, 1, 0
      %v98 = vsel %vm82, 1, 0
      %v99 = vcvt.s32.f32 %v83
      %v100 = vcvt.s32.f32 %v84
      %v101 = vcvt.s32.f32 %v85
      %v102 = vcvt.s32.f32 %v86
      %v103 = vcvt.s32.f32 %v87
      %v104 = vcvt.s32.f32 %v88
      %v105 = vcvt.s32.f32 %v89
      %v106 = vcvt.s32.f32 %v90
      %v107 = vcvt.s32.f32 %v91
      %v108 = vcvt.s32.f32 %v92
      %v109 = vcvt.s32.f32 %v93
      %v110 = vcvt.s32.f32 %v94
      %v111 = vcvt.s32.f32 %v95
      %v112 = vcvt.s32.f32 %v96
      %v113 = vcvt.s32.f32 %v97
      %v114 = vcvt.s32.f32 %v98
      %v115 = vpack.c.bf16 %v100, %v99
      %v116 = vpack.c.bf16 %v102, %v101
      %v117 = vpack.c.bf16 %v104, %v103
      %v118 = vpack.c.bf16 %v106, %v105
      %v119 = vpack.c.bf16 %v108, %v107
      %v120 = vpack.c.bf16 %v110, %v109
      %v121 = vpack.c.bf16 %v112, %v111
      %v122 = vpack.c.bf16 %v114, %v113
      %123 = vmatprep.subr.bf16.mxu0 0
      %124 = vmatpush1.bf16.xpose.msra.mxu0 %v115
      %125 = vmatprep.subr.bf16.mxu0 0
      %126 = vmatpush1.bf16.xpose.msra.mxu0 %v116
      %127 = vmatprep.subr.bf16.mxu0 0
      %128 = vmatpush1.bf16.xpose.msra.mxu0 %v117
      %129 = vmatprep.subr.bf16.mxu0 0
      %130 = vmatpush1.bf16.xpose.msra.mxu0 %v118
      %131 = vmatprep.subr.bf16.mxu0 0
      %132 = vmatpush1.bf16.xpose.msra.mxu0 %v119
      %133 = vmatprep.subr.bf16.mxu0 0
      %134 = vmatpush1.bf16.xpose.msra.mxu0 %v120
      %135 = vmatprep.subr.bf16.mxu0 0
      %136 = vmatpush1.bf16.xpose.msra.mxu0 %v121
      %137 = vmatprep.subr.bf16.mxu0 0
      %138 = vmatpush1.bf16.xpose.msra.mxu0 %v122
      %139 = vmatprep.subr.bf16.mxu0 0
      %140 = vmatpush1.bf16.xpose.msra.mxu0 0
      %141 = vmatprep.subr.bf16.mxu0 0
      %142 = vmatpush1.bf16.xpose.msra.mxu0 0
      %143 = vmatprep.subr.bf16.mxu0 0
      %144 = vmatpush1.bf16.xpose.msra.mxu0 0
      %145 = vmatprep.subr.bf16.mxu0 0
      %146 = vmatpush1.bf16.xpose.msra.mxu0 0
      %147 = vmatprep.subr.bf16.mxu0 0
      %148 = vmatpush1.bf16.xpose.msra.mxu0 0
      %149 = vmatprep.subr.bf16.mxu0 0
      %150 = vmatpush1.bf16.xpose.msra.mxu0 0
      %151 = vmatprep.subr.bf16.mxu0 0
      %152 = vmatpush1.bf16.xpose.msra.mxu0 0
      %153 = vmatprep.subr.bf16.mxu0 0
      %154 = vmatpush1.bf16.xpose.msra.mxu0 0
      %155 = vmatprep.mubr.bf16.mxu0 0
      %156 = vmatmul.mubr.bf16.gmra.mrb[0].mxu0 %v62
      %v157 = vpop.f32.mrb[0].mxu0
      %v158 = vadd.f32 0.0, %v157
      %v159 = vpop.f32.mrb[0].mxu0
      %v160 = vpop.f32.mrb[0].mxu0
      %v161 = vadd.f32 0.0, %v160
      %v162 = vpop.f32.mrb[0].mxu0
      %163 = vdwg.mxu0
      %164 = vst [vmem:[#allocation5] sm:$0xff] %v158
      %165 = vst [vmem:[#allocation5 + $0x8] sm:$0xff] %v161
    $region13: #{tpu_custom_call.1} parent=1 // pred_fallthru
      _
    %p166 = pneg %p25
    // Predicated region
    $region14: #{tpu_custom_call.1} parent=1 // pred_check
      _
    $region15: #{tpu_custom_call.1} parent=1 // pred_check_branch
      %168 = sbr.rel (%p25) target = $region17
    $region16: #{tpu_custom_call.1} parent=1 // pred_region
      %169 = vst [vmem:[#allocation5] sm:$0xff] 0.0
      %170 = vst [vmem:[#allocation5 + $0x8] sm:$0xff] 0.0
    $region17: #{tpu_custom_call.1} parent=1 // pred_fallthru
      _
    // Predicated region
    $region18: #{tpu_custom_call.1} parent=1 // pred_check
      _
    $region19: #{tpu_custom_call.1} parent=1 // pred_check_branch
      %172 = sbr.rel (0) target = $region21
    $region20: #{tpu_custom_call.1} parent=1 // pred_region
      %s174 = ssub.s32 256, 256
      %175 = vsyncadd [#allocation6], %s174
      %s176 = sshll.u32 [#allocation5], 4
      %s177 = int_to_ptr.vmem [resolvable:$true] %s176
      %182 = dma.vmem_to_hbm [thread:$0]  %s177, 256, %s4, [#allocation6], 128, 128, 8
    $region21: #{tpu_custom_call.1} parent=1 // pred_fallthru
      _
    // Predicated region
    $region22: #{tpu_custom_call.1} parent=1 // pred_check
      _
    $region23: #{tpu_custom_call.1} parent=1 // pred_check_branch
      %184 = sbr.rel (0) target = $region25
    $region24: #{tpu_custom_call.1} parent=1 // pred_region
      %185 = dma.done [#allocation6], 256
    $region25: #{tpu_custom_call.1} parent=1 // pred_fallthru
      _
    %186 = vsyncpa [#allocation6], 1

</llo_original>
